<compile_context>
chip_gen: v7x
topology: tpu7x:2x2x1
jax: 0.10.0
libtpu: 0.0.40
codegen_flags: <defaults>
</compile_context>

<pallas_src>
import math
import functools

import jax
import jax.numpy as jnp
from jax.experimental import pallas as pl
from jax.experimental.pallas import tpu as pltpu


D_MODEL = 10          # config.d_model
D_HIDDEN = 14         # hard-coded hidden width in MLPC
_SQRT1_2 = 1.0 / math.sqrt(2.0)

T_ROWS_MAX = 4096     # packed rows per grid step (tokens/step = T_ROWS_MAX * group)


def _default_group():
    """Tokens packed per MXU row: 9 on v5e (128-lane MXU), 12 on v6e/v7x (256-lane)."""
    try:
        kind = jax.devices()[0].device_kind.lower()
    except Exception:
        return 12
    if "v5 lite" in kind or "v5lite" in kind or "v5e" in kind:
        return 9
    return 12


def _mlpc_kernel(x_ref, w1_ref, w2_ref, o_ref, *, approximate_gelu):
    # x_ref : (T, D_MODEL*G)          G tokens packed per row (contiguous in HBM)
    # w1_ref: (D_MODEL*G, D_HIDDEN*G) = blockdiag(W1^T) x G  (MXU-stationary, resident)
    # w2_ref: (D_HIDDEN*G, D_MODEL*G) = blockdiag(W2^T) x G
    x = x_ref[...]

    # c_fc: h = x @ blockdiag(W1^T)   (MXU, f32 accumulate)
    h = jnp.dot(x, w1_ref[...], preferred_element_type=jnp.float32)

    if approximate_gelu:
        # tanh-GELU uses the EUP slot (nearly free) — only when numerics allow.
        h = jax.nn.gelu(h, approximate=True)
    else:
        # exact GELU (nn.GELU default): 0.5 * h * (1 + erf(h / sqrt(2)))
        h = 0.5 * h * (1.0 + jax.lax.erf(h * _SQRT1_2))

    # c_proj: y = h @ blockdiag(W2^T)
    y = jnp.dot(h, w2_ref[...], preferred_element_type=jnp.float32)

    # dropout = Identity (config.dropout == 0.0)
    o_ref[...] = y.astype(o_ref.dtype)


def mlpc_forward(x, w1, w2, *, group=None, rows_per_tile=T_ROWS_MAX,
                 approximate_gelu=False):
    """MLPC forward.

    x : (B, S, d_model) float32
    w1: (14, d_model)   PyTorch (out_features, in_features) layout of c_fc.weight
    w2: (d_model, 14)   PyTorch layout of c_proj.weight
    Returns (B, S, d_model).
    """
    B, S, D = x.shape
    assert D == D_MODEL
    M = B * S

    G = _default_group() if group is None else group
    DG, HG = D_MODEL * G, D_HIDDEN * G

    # ---- token packing: free, contiguous reshapes (no transpose) -------------
    rows = pl.cdiv(M, G)
    rows_p = max(8, pl.cdiv(rows, 8) * 8)          # keep packed-row axis a multiple of 8
    Mp = rows_p * G

    x2d = x.reshape(M, D)
    if Mp != M:
        # Only pads by < 8*G tokens; gelu(0)=0 so pad rows stay zero.
        # TODO(synk): choose B*S % (8*group) == 0 upstream to skip this copy entirely.
        x2d = jnp.pad(x2d, ((0, Mp - M), (0, 0)))
    x_pk = x2d.reshape(rows_p, DG)                 # contiguous in HBM

    # ---- block-diagonal packed weights (tiny, VMEM-resident, MXU-stationary) --
    eye = jnp.eye(G, dtype=w1.dtype)
    w1_pk = jnp.kron(eye, w1.T)                    # (10G, 14G)
    w2_pk = jnp.kron(eye, w2.T)                    # (14G, 10G)

    # ---- 1-D grid over packed rows; ragged last block; megacore "parallel" ----
    t_rows = min(int(rows_per_tile), rows_p)
    t_rows = max(8, (t_rows // 8) * 8)
    grid = (pl.cdiv(rows_p, t_rows),)

    kernel = functools.partial(_mlpc_kernel, approximate_gelu=approximate_gelu)

    out_pk = pl.pallas_call(
        kernel,
        out_shape=jax.ShapeDtypeStruct((rows_p, DG), x.dtype),
        grid=grid,
        in_specs=[
            pl.BlockSpec((t_rows, DG), lambda i: (i, 0)),    # activations, pipelined
            pl.BlockSpec((DG, HG), lambda i: (0, 0)),        # packed W1, resident
            pl.BlockSpec((HG, DG), lambda i: (0, 0)),        # packed W2, resident
        ],
        out_specs=pl.BlockSpec((t_rows, DG), lambda i: (i, 0)),
        compiler_params=pltpu.CompilerParams(
            dimension_semantics=("parallel",),               # independent token tiles
            # above v5e(16M)/v6e(32M) scoped defaults, below v7x 64 MiB physical
            vmem_limit_bytes=48 * 1024 * 1024,
        ),
        cost_estimate=pl.CostEstimate(
            flops=2 * Mp * (D_MODEL * D_HIDDEN + D_HIDDEN * D_MODEL),
            transcendentals=Mp * D_HIDDEN,
            bytes_accessed=2 * Mp * D_MODEL * 4 + 2 * DG * HG * 4,
        ),
    )(x_pk, w1_pk, w2_pk)

    y2d = out_pk.reshape(Mp, D_MODEL)
    if Mp != M:
        y2d = y2d[:M]
    return y2d.reshape(B, S, D_MODEL)


def init_params(key):
    """Deterministic synthetic params matching nn.Linear (no bias), PyTorch (out, in) layout."""
    k1, k2 = jax.random.split(key)
    b1 = 1.0 / math.sqrt(D_MODEL)    # fan_in of c_fc
    b2 = 1.0 / math.sqrt(D_HIDDEN)   # fan_in of c_proj
    w1 = jax.random.uniform(k1, (D_HIDDEN, D_MODEL), jnp.float32, -b1, b1)
    w2 = jax.random.uniform(k2, (D_MODEL, D_HIDDEN), jnp.float32, -b2, b2)
    return w1, w2


if __name__ == "__main__":
    key = jax.random.PRNGKey(0)
    kx, kp = jax.random.split(key)

    B, S = 2, 8  # batch=2, seq=8, d_model=10
    x = jax.random.normal(kx, (B, S, D_MODEL), jnp.float32)
    w1, w2 = init_params(kp)

    y = mlpc_forward(x, w1, w2)
    jax.block_until_ready(y)

    # Pure-JAX reference (PyTorch semantics: x @ W.T, exact erf GELU, dropout=Identity).
    h_ref = x @ w1.T
    h_ref = 0.5 * h_ref * (1.0 + jax.lax.erf(h_ref * _SQRT1_2))
    y_ref = h_ref @ w2.T

    assert y.shape == y_ref.shape
    assert jnp.allclose(y, y_ref, atol=1e-5, rtol=1e-5), "mismatch vs reference"

    print("KERNEL_OK")
</pallas_src>

<mosaic_0001>
module attributes {stable_mosaic.version = 11 : i64} {
  func.func @_mlpc_kernel(%arg0: i32, %arg1: memref<8x120xf32, #tpu.memory_space<vmem>>, %arg2: memref<120x168xf32, #tpu.memory_space<vmem>>, %arg3: memref<168x120xf32, #tpu.memory_space<vmem>>, %arg4: memref<8x120xf32, #tpu.memory_space<vmem>>) attributes {dimension_semantics = [#tpu.dimension_semantics<parallel>], iteration_bounds = array<i64: 1>, scalar_prefetch = 0 : i64, scratch_operands = 0 : i64, tpu.core_type = #tpu.core_type<tc>, window_params = [{transform_indices = @transform_0, window_bounds = array<i64: 8, 120>}, {pipeline_mode = #tpu.pipeline_mode<synchronous>, transform_indices = @transform_1, window_bounds = array<i64: 120, 168>}, {pipeline_mode = #tpu.pipeline_mode<synchronous>, transform_indices = @transform_2, window_bounds = array<i64: 168, 120>}, {transform_indices = @transform_3, window_bounds = array<i64: 8, 120>}]} {
    %c0 = arith.constant 0 : index
    %c0_0 = arith.constant 0 : index
    %0 = vector.load %arg1[%c0, %c0_0] : memref<8x120xf32, #tpu.memory_space<vmem>>, vector<8x120xf32>
    %c0_1 = arith.constant 0 : index
    %c0_2 = arith.constant 0 : index
    %1 = vector.load %arg2[%c0_1, %c0_2] : memref<120x168xf32, #tpu.memory_space<vmem>>, vector<120x168xf32>
    %cst = arith.constant dense<0.000000e+00> : vector<8x168xf32>
    %2 = tpu.matmul %0, %1, %cst {dimension_numbers = #tpu.dot_dimension_numbers<[1], [0], [0], [1], [0, 0, 1, 1], [], []>} : vector<8x120xf32>, vector<120x168xf32>, vector<8x168xf32> -> vector<8x168xf32>
    %cst_3 = arith.constant 5.000000e-01 : f32
    %3 = vector.broadcast %cst_3 : f32 to vector<8x168xf32>
    %4 = arith.mulf %3, %2 : vector<8x168xf32>
    %cst_4 = arith.constant 0.707106769 : f32
    %5 = vector.broadcast %cst_4 : f32 to vector<8x168xf32>
    %6 = arith.mulf %2, %5 : vector<8x168xf32>
    %7 = math.erf %6 : vector<8x168xf32>
    %cst_5 = arith.constant 1.000000e+00 : f32
    %8 = vector.broadcast %cst_5 : f32 to vector<8x168xf32>
    %9 = arith.addf %8, %7 : vector<8x168xf32>
    %10 = arith.mulf %4, %9 : vector<8x168xf32>
    %c0_6 = arith.constant 0 : index
    %c0_7 = arith.constant 0 : index
    %11 = vector.load %arg3[%c0_6, %c0_7] : memref<168x120xf32, #tpu.memory_space<vmem>>, vector<168x120xf32>
    %cst_8 = arith.constant dense<0.000000e+00> : vector<8x120xf32>
    %12 = tpu.matmul %10, %11, %cst_8 {dimension_numbers = #tpu.dot_dimension_numbers<[1], [0], [0], [1], [0, 0, 1, 1], [], []>} : vector<8x168xf32>, vector<168x120xf32>, vector<8x120xf32> -> vector<8x120xf32>
    %c0_9 = arith.constant 0 : index
    %c0_10 = arith.constant 0 : index
    %13 = vector.load %arg4[%c0_9, %c0_10] : memref<8x120xf32, #tpu.memory_space<vmem>>, vector<8x120xf32>
    tpu.vector_store %arg4[%c0_9, %c0_10], %12 {strides = array<i32>} : memref<8x120xf32, #tpu.memory_space<vmem>>, vector<8x120xf32>,
    return
  }
  func.func @transform_0(%arg0: i32) -> (i32, i32) {
    %c0_i32 = arith.constant 0 : i32
    %c0_i32_0 = arith.constant 0 : i32
    return %arg0, %c0_i32 : i32, i32
  }
  func.func @transform_1(%arg0: i32) -> (i32, i32) {
    %c0_i32 = arith.constant 0 : i32
    %c0_i32_0 = arith.constant 0 : i32
    %c0_i32_1 = arith.constant 0 : i32
    return %c0_i32, %c0_i32_0 : i32, i32
  }
  func.func @transform_2(%arg0: i32) -> (i32, i32) {
    %c0_i32 = arith.constant 0 : i32
    %c0_i32_0 = arith.constant 0 : i32
    %c0_i32_1 = arith.constant 0 : i32
    return %c0_i32, %c0_i32_0 : i32, i32
  }
  func.func @transform_3(%arg0: i32) -> (i32, i32) {
    %c0_i32 = arith.constant 0 : i32
    %c0_i32_0 = arith.constant 0 : i32
    return %arg0, %c0_i32 : i32, i32
  }
}

</mosaic_0001>

<llo_original>
// kernel: tpu_custom_call.1
$region0: #{tpu_custom_call.1}
  #allocation0 [shape = 'u32[]', space=smem, size = 0x4, offset = 0x4, fixed_abs, tag = 'smem constant byte address 0x4 - core index']
  #allocation1 [shape = 'u32[144,128]{1,0:T(1,128)}', space=vmem, size = 0x12000, scoped, tag = 'internal scratch']
  %s0 = inlined_call_operand.vmem [shape: f32[8,120], index: 0, kind: input, shape index: {}]
  %s1 = inlined_call_operand.vmem [shape: f32[120,168], index: 1, kind: input, shape index: {}]
  %s2 = inlined_call_operand.vmem [shape: f32[168,120], index: 2, kind: input, shape index: {}]
  %s3 = inlined_call_operand.hbm [shape: f32[8,120], index: 3, kind: output, shape index: {}]
  %s4 = sld [smem:[#allocation0]]
  $region22: #{tpu_custom_call.1} parent=0
    _
  %s6 = ssub.s32 1, %s4
  %s7 = scalar_select 0, %s6, %s4
  $region1: #{tpu_custom_call.1} parent=0
    #allocation2 [shape = 'u8[4096]{0}', space=vmem, size = 0x1000, scoped, tag = 'output window, operand 0, single buffered']
    #allocation3 [shape = 's32[1]{0}', space=sflag, size = 0x4, scoped, tag = 'scoped memory for tpu_custom_call.1']
    %8 = vsyncpa [#allocation3], 0
    // Predicated region
    $region2: #{tpu_custom_call.1} parent=1 // pred_check
      _
    $region3: #{tpu_custom_call.1} parent=1 // pred_check_branch
      %10 = sbr.rel (0) target = $region5
    $region4: #{tpu_custom_call.1} parent=1 // pred_region
      _
    $region5: #{tpu_custom_call.1} parent=1 // pred_fallthru
      _
    // Predicated region
    $region6: #{tpu_custom_call.1} parent=1 // pred_check
      _
    $region7: #{tpu_custom_call.1} parent=1 // pred_check_branch
      %12 = sbr.rel (0) target = $region9
    $region8: #{tpu_custom_call.1} parent=1 // pred_region
      _
    $region9: #{tpu_custom_call.1} parent=1 // pred_fallthru
      _
    // Predicated region
    $region10: #{tpu_custom_call.1} parent=1 // pred_check
      _
    $region11: #{tpu_custom_call.1} parent=1 // pred_check_branch
      %14 = sbr.rel (0) target = $region13
    $region12: #{tpu_custom_call.1} parent=1 // pred_region
      _
    $region13: #{tpu_custom_call.1} parent=1 // pred_fallthru
      _
    %v15 = vld [vmem:[%s0] sm:$0xff]
    %v16 = vld [vmem:[%s1] sm:$0xff]
    %v17 = vld [vmem:[%s1 + $0x8] sm:$0xff]
    %v18 = vld [vmem:[%s1 + $0x10] sm:$0xff]
    %v19 = vld [vmem:[%s1 + $0x18] sm:$0xff]
    %v20 = vld [vmem:[%s1 + $0x20] sm:$0xff]
    %v21 = vld [vmem:[%s1 + $0x28] sm:$0xff]
    %v22 = vld [vmem:[%s1 + $0x30] sm:$0xff]
    %v23 = vld [vmem:[%s1 + $0x38] sm:$0xff]
    %v24 = vld [vmem:[%s1 + $0x40] sm:$0xff]
    %v25 = vld [vmem:[%s1 + $0x48] sm:$0xff]
    %v26 = vld [vmem:[%s1 + $0x50] sm:$0xff]
    %v27 = vld [vmem:[%s1 + $0x58] sm:$0xff]
    %v28 = vld [vmem:[%s1 + $0x60] sm:$0xff]
    %v29 = vld [vmem:[%s1 + $0x68] sm:$0xff]
    %v30 = vld [vmem:[%s1 + $0x70] sm:$0xff]
    %v31 = vld [vmem:[%s1 + $0x78] sm:$0xff]
    %v32 = vld [vmem:[%s1 + $0x80] sm:$0xff]
    %v33 = vld [vmem:[%s1 + $0x88] sm:$0xff]
    %v34 = vld [vmem:[%s1 + $0x90] sm:$0xff]
    %v35 = vld [vmem:[%s1 + $0x98] sm:$0xff]
    %v36 = vld [vmem:[%s1 + $0xa0] sm:$0xff]
    %v37 = vld [vmem:[%s1 + $0xa8] sm:$0xff]
    %v38 = vld [vmem:[%s1 + $0xb0] sm:$0xff]
    %v39 = vld [vmem:[%s1 + $0xb8] sm:$0xff]
    %v40 = vld [vmem:[%s1 + $0xc0] sm:$0xff]
    %v41 = vld [vmem:[%s1 + $0xc8] sm:$0xff]
    %v42 = vld [vmem:[%s1 + $0xd0] sm:$0xff]
    %v43 = vld [vmem:[%s1 + $0xd8] sm:$0xff]
    %v44 = vld [vmem:[%s1 + $0xe0] sm:$0xff]
    %v45 = vld [vmem:[%s1 + $0xe8] sm:$0xff]
    %vm46 = vcmask 982016
    %v48 = vsel %vm46, %v15, 0
    %50 = vmatprep.subr.mxu0 %v17
    %51 = vmatpush1.msra.mxu0 %v16
    %52 = vmatprep.subr.mxu0 %v19
    %53 = vmatpush1.msra.mxu0 %v18
    %54 = vmatprep.subr.mxu0 %v21
    %55 = vmatpush1.msra.mxu0 %v20
    %56 = vmatprep.subr.mxu0 %v23
    %57 = vmatpush1.msra.mxu0 %v22
    %58 = vmatprep.subr.mxu0 %v25
    %59 = vmatpush1.msra.mxu0 %v24
    %60 = vmatprep.subr.mxu0 %v27
    %61 = vmatpush1.msra.mxu0 %v26
    %62 = vmatprep.subr.mxu0 %v29
    %63 = vmatpush1.msra.mxu0 %v28
    %64 = vmatprep.subr.mxu0 %v31
    %65 = vmatpush1.msra.mxu0 %v30
    %66 = vmatprep.subr.mxu0 %v33
    %67 = vmatpush1.msra.mxu0 %v32
    %68 = vmatprep.subr.mxu0 %v35
    %69 = vmatpush1.msra.mxu0 %v34
    %70 = vmatprep.subr.mxu0 %v37
    %71 = vmatpush1.msra.mxu0 %v36
    %72 = vmatprep.subr.mxu0 %v39
    %73 = vmatpush1.msra.mxu0 %v38
    %74 = vmatprep.subr.mxu0 %v41
    %75 = vmatpush1.msra.mxu0 %v40
    %76 = vmatprep.subr.mxu0 %v43
    %77 = vmatpush1.msra.mxu0 %v42
    %78 = vmatprep.subr.mxu0 %v45
    %79 = vmatpush1.msra.mxu0 %v44
    %80 = vmatprep.subr.mxu0 0.0
    %81 = vmatpush1.msra.mxu0 0.0
    %82 = vmatprep.subr.mxu0 0.0
    %83 = vmatpush1.msra.mxu0 0.0
    %84 = vmatprep.subr.mxu0 0.0
    %85 = vmatpush1.msra.mxu0 0.0
    %86 = vmatprep.subr.mxu0 0.0
    %87 = vmatpush1.msra.mxu0 0.0
    %88 = vmatprep.subr.mxu0 0.0
    %89 = vmatpush1.msra.mxu0 0.0
    %90 = vmatprep.subr.mxu0 0.0
    %91 = vmatpush1.msra.mxu0 0.0
    %92 = vmatprep.subr.mxu0 0.0
    %93 = vmatpush1.msra.mxu0 0.0
    %94 = vmatprep.subr.mxu0 0.0
    %95 = vmatpush1.msra.mxu0 0.0
    %96 = vmatprep.subr.mxu0 0.0
    %97 = vmatpush1.msra.mxu0 0.0
    %98 = vmatprep.subr.mxu0 0.0
    %99 = vmatpush1.msra.mxu0 0.0
    %100 = vmatprep.subr.mxu0 0.0
    %101 = vmatpush1.msra.mxu0 0.0
    %102 = vmatprep.subr.mxu0 0.0
    %103 = vmatpush1.msra.mxu0 0.0
    %104 = vmatprep.subr.mxu0 0.0
    %105 = vmatpush1.msra.mxu0 0.0
    %106 = vmatprep.subr.mxu0 0.0
    %107 = vmatpush1.msra.mxu0 0.0
    %108 = vmatprep.subr.mxu0 0.0
    %109 = vmatpush1.msra.mxu0 0.0
    %110 = vmatprep.subr.mxu0 0.0
    %111 = vmatpush1.msra.mxu0 0.0
    %112 = vmatprep.subr.mxu0 0.0
    %113 = vmatpush1.msra.mxu0 0.0
    %114 = vmatprep.mubr.f32.mxu0 0.0
    %115 = vmatmul.mubr.f32.gmra.mrb[0].mxu0 %v48
    %v116 = vpop.f32.mrb[0].mxu0
    %v117 = vadd.f32 0.0, %v116
    %v118 = vpop.f32.mrb[0].mxu0
    %v119 = vadd.f32 0.0, %v118
    %120 = vdwg.mxu0
    %v121 = vmul.f32 %v117, 0.5
    %v122 = vmul.f32 %v119, 0.5
    %v123 = vmul.f32 %v117, 0.70710677
    %v124 = vmul.f32 %v119, 0.70710677
    %v125 = verf.f32.pop %v123
    %v126 = verf.f32.pop %v124
    %v127 = vadd.f32 %v125, 1.0
    %v128 = vadd.f32 %v126, 1.0
    %v129 = vmul.f32 %v121, %v127
    %v130 = vmul.f32 %v122, %v128
    %v131 = vld [vmem:[%s2] sm:$0xff]
    %v132 = vld [vmem:[%s2 + $0x8] sm:$0xff]
    %v133 = vld [vmem:[%s2 + $0x10] sm:$0xff]
    %v134 = vld [vmem:[%s2 + $0x18] sm:$0xff]
    %v135 = vld [vmem:[%s2 + $0x20] sm:$0xff]
    %v136 = vld [vmem:[%s2 + $0x28] sm:$0xff]
    %v137 = vld [vmem:[%s2 + $0x30] sm:$0xff]
    %v138 = vld [vmem:[%s2 + $0x38] sm:$0xff]
    %v139 = vld [vmem:[%s2 + $0x40] sm:$0xff]
    %v140 = vld [vmem:[%s2 + $0x48] sm:$0xff]
    %v141 = vld [vmem:[%s2 + $0x50] sm:$0xff]
    %v142 = vld [vmem:[%s2 + $0x58] sm:$0xff]
    %v143 = vld [vmem:[%s2 + $0x60] sm:$0xff]
    %v144 = vld [vmem:[%s2 + $0x68] sm:$0xff]
    %v145 = vld [vmem:[%s2 + $0x70] sm:$0xff]
    %v146 = vld [vmem:[%s2 + $0x78] sm:$0xff]
    %v147 = vld [vmem:[%s2 + $0x80] sm:$0xff]
    %v148 = vld [vmem:[%s2 + $0x88] sm:$0xff]
    %v149 = vld [vmem:[%s2 + $0x90] sm:$0xff]
    %v150 = vld [vmem:[%s2 + $0x98] sm:$0xff]
    %v151 = vld [vmem:[%s2 + $0xa0] sm:$0xff]
    %vm152 = vcmask 326656
    %v154 = vsel %vm152, %v130, 0
    %156 = vmatprep.subr.mxu0 0.0
    %157 = vmatpush1.msra.mxu0 %v131
    %158 = vmatprep.subr.mxu0 0.0
    %159 = vmatpush1.msra.mxu0 %v132
    %160 = vmatprep.subr.mxu0 0.0
    %161 = vmatpush1.msra.mxu0 %v133
    %162 = vmatprep.subr.mxu0 0.0
    %163 = vmatpush1.msra.mxu0 %v134
    %164 = vmatprep.subr.mxu0 0.0
    %165 = vmatpush1.msra.mxu0 %v135
    %166 = vmatprep.subr.mxu0 0.0
    %167 = vmatpush1.msra.mxu0 %v136
    %168 = vmatprep.subr.mxu0 0.0
    %169 = vmatpush1.msra.mxu0 %v137
    %170 = vmatprep.subr.mxu0 0.0
    %171 = vmatpush1.msra.mxu0 %v138
    %172 = vmatprep.subr.mxu0 0.0
    %173 = vmatpush1.msra.mxu0 %v139
    %174 = vmatprep.subr.mxu0 0.0
    %175 = vmatpush1.msra.mxu0 %v140
    %176 = vmatprep.subr.mxu0 0.0
    %177 = vmatpush1.msra.mxu0 %v141
    %178 = vmatprep.subr.mxu0 0.0
    %179 = vmatpush1.msra.mxu0 %v142
    %180 = vmatprep.subr.mxu0 0.0
    %181 = vmatpush1.msra.mxu0 %v143
    %182 = vmatprep.subr.mxu0 0.0
    %183 = vmatpush1.msra.mxu0 %v144
    %184 = vmatprep.subr.mxu0 0.0
    %185 = vmatpush1.msra.mxu0 %v145
    %186 = vmatprep.subr.mxu0 0.0
    %187 = vmatpush1.msra.mxu0 %v146
    %188 = vmatprep.subr.mxu0 0.0
    %189 = vmatpush1.msra.mxu0 %v147
    %190 = vmatprep.subr.mxu0 0.0
    %191 = vmatpush1.msra.mxu0 %v148
    %192 = vmatprep.subr.mxu0 0.0
    %193 = vmatpush1.msra.mxu0 %v149
    %194 = vmatprep.subr.mxu0 0.0
    %195 = vmatpush1.msra.mxu0 %v150
    %196 = vmatprep.subr.mxu0 0.0
    %197 = vmatpush1.msra.mxu0 %v151
    %198 = vmatprep.subr.mxu0 0.0
    %199 = vmatpush1.msra.mxu0 0.0
    %200 = vmatprep.subr.mxu0 0.0
    %201 = vmatpush1.msra.mxu0 0.0
    %202 = vmatprep.subr.mxu0 0.0
    %203 = vmatpush1.msra.mxu0 0.0
    %204 = vmatprep.subr.mxu0 0.0
    %205 = vmatpush1.msra.mxu0 0.0
    %206 = vmatprep.subr.mxu0 0.0
    %207 = vmatpush1.msra.mxu0 0.0
    %208 = vmatprep.subr.mxu0 0.0
    %209 = vmatpush1.msra.mxu0 0.0
    %210 = vmatprep.subr.mxu0 0.0
    %211 = vmatpush1.msra.mxu0 0.0
    %212 = vmatprep.subr.mxu0 0.0
    %213 = vmatpush1.msra.mxu0 0.0
    %214 = vmatprep.subr.mxu0 0.0
    %215 = vmatpush1.msra.mxu0 0.0
    %216 = vmatprep.subr.mxu0 0.0
    %217 = vmatpush1.msra.mxu0 0.0
    %218 = vmatprep.subr.mxu0 0.0
    %219 = vmatpush1.msra.mxu0 0.0
    %220 = vmatprep.mubr.f32.mxu0 %v154
    %221 = vmatmul.mubr.f32.gmra.mrb[0].mxu0 %v129
    %v222 = vpop.f32.mrb[0].mxu0
    %v223 = vadd.f32 0.0, %v222
    %v224 = vpop.f32.mrb[0].mxu0
    %225 = vdwg.mxu0
    %226 = vst.msk [vmem:[#allocation2] sm:$0xff] %vm46, %v223
    // Predicated region
    $region14: #{tpu_custom_call.1} parent=1 // pred_check
      _
    $region15: #{tpu_custom_call.1} parent=1 // pred_check_branch
      %228 = sbr.rel (0) target = $region17
    $region16: #{tpu_custom_call.1} parent=1 // pred_region
      %s230 = ssub.s32 128, 128
      %231 = vsyncadd [#allocation3], %s230
      %s233 = sshll.u32 [#allocation2], 4
      %s234 = int_to_ptr.vmem [resolvable:$true] %s233
      %236 = dma.vmem_to_hbm [thread:$0]  %s234, 128, %s3, [#allocation3]
    $region17: #{tpu_custom_call.1} parent=1 // pred_fallthru
      _
    // Predicated region
    $region18: #{tpu_custom_call.1} parent=1 // pred_check
      _
    $region19: #{tpu_custom_call.1} parent=1 // pred_check_branch
      %238 = sbr.rel (0) target = $region21
    $region20: #{tpu_custom_call.1} parent=1 // pred_region
      %239 = dma.done [#allocation3], 128
    $region21: #{tpu_custom_call.1} parent=1 // pred_fallthru
      _
    %240 = vsyncpa [#allocation3], 1

</llo_original>
